<compile_context>
chip_gen: v7x
topology: tpu7x:2x2x1
jax: 0.10.0
libtpu: 0.0.40
codegen_flags: <defaults>
</compile_context>

<pallas_src>
import functools
import math

import jax
import jax.numpy as jnp
from jax.experimental import pallas as pl
from jax.experimental.pallas import tpu as pltpu


_TARGET_OUT_TILE_BYTES = 2 * 1024 * 1024   # ~2 MiB f32 output tile per grid step
_MAX_PACK_WIDTH = 4096                     # max lane-dense packed row width
_MAX_REP_BYTES = 1 << 20                   # max bf16 replication-matrix size


def _round_up(v, m):
    return ((v + m - 1) // m) * m


def _pick_row_tile(n_rows, lane_width):
    """Rows per block: ~2 MiB f32 output tile, capped for v7x grid sharding.

    The int32 input tile's lane dim is padded to 128 in VMEM, so at
    lane_width == 128 the input tile is as large as the output tile; the
    double-buffered footprint (in + out + in-kernel temps) stays ~8-12 MiB,
    under v5e's 16 MiB scoped-VMEM default.
    """
    tn = _TARGET_OUT_TILE_BYTES // (max(lane_width, 128) * 4)
    tn = max(8, (tn // 8) * 8)
    # Keep >= ~8 row-grid steps so both v7x TensorCores get work; per-step
    # overhead (~0.35 us) is negligible at these tile sizes on v5e/v6e.
    tn = min(tn, max(8, _round_up(pl.cdiv(n_rows, 8), 8)))
    return tn


def _one_hot_packed_kernel(x_ref, rep_ref, cls_ref, o_ref, *, num_classes):
    # x_ref:   (tn, pack) int32   -- `pack` consecutive logical rows per block row
    # rep_ref: (pack, W)  bf16    -- 0/1 replication matrix, W = pack*num_classes
    # cls_ref: (1, W)     float32 -- [0..C-1, 0..C-1, ...] repeated `pack` times
    # o_ref:   (tn, W)    float32 -- lane-dense output (W is a multiple of 128)
    x = x_ref[...]
    # Clamp invalid / -1-sentinel / garbage indices (the partial last row block
    # reads past the array; its write-back is masked by Pallas anyway) to -1 so
    # they never match any class.
    x = jnp.where(jnp.logical_and(x >= 0, x < num_classes), x, -1)
    # Replicate each index across its `num_classes` lanes with ONE MXU matmul
    # (bf16 operands, f32 accumulation; values in [-1, 128) are exact in bf16).
    # The MXU slot is otherwise idle here, so this is essentially free and the
    # per-output-element VPU work is a single compare + convert.
    x_rep = jnp.dot(x.astype(jnp.float32).astype(jnp.bfloat16), rep_ref[...],
                    preferred_element_type=jnp.float32)          # (tn, W)
    o_ref[...] = (x_rep == cls_ref[...]).astype(jnp.float32)


def _one_hot_tiled_kernel(x_ref, o_ref, *, tc):
    # x_ref: (tn, 1) int32, o_ref: (tn, tc) float32 -- class tile j.
    # Classes >= num_classes in a padded last class tile (and garbage rows from
    # a partial last row tile) are harmless: their write-back is masked.
    j = pl.program_id(1)
    classes = j * tc + jax.lax.broadcasted_iota(jnp.int32, o_ref.shape, 1)
    o_ref[...] = (x_ref[...] == classes).astype(jnp.float32)


@functools.partial(jax.jit, static_argnames=("num_classes",))
def one_hot_pallas(x, *, num_classes):
    """Pallas equivalent of F.one_hot(x.long(), num_classes).float()."""
    orig_shape = x.shape
    # NOTE: int64 inputs (with jax x64 enabled) are truncated to int32 here;
    # class indices are assumed to fit in int32.
    x_flat = x.astype(jnp.int32).reshape(-1)
    n = x_flat.shape[0]
    c = num_classes

    pack = 128 // math.gcd(c, 128)
    width = pack * c                        # lcm(c, 128): minimal lane-dense row
    rep_bytes = pack * width * 2
    use_packed = (c < 128) and (width <= _MAX_PACK_WIDTH) and (rep_bytes <= _MAX_REP_BYTES)

    if use_packed:
        # ---- Lane-dense packed path (small num_classes, any n) ----
        rows = pl.cdiv(n, pack)
        n_pad = rows * pack
        if n_pad != n:
            # -1 sentinel: padded rows one-hot to all zeros, sliced away below.
            x_flat = jnp.concatenate(
                [x_flat, jnp.full((n_pad - n,), -1, dtype=jnp.int32)])
        x2 = x_flat.reshape(rows, pack)

        lane = jnp.arange(width, dtype=jnp.int32)
        rep = (lane[None, :] // c ==
               jnp.arange(pack, dtype=jnp.int32)[:, None]).astype(jnp.bfloat16)
        cls = (lane % c).astype(jnp.float32).reshape(1, width)

        tn = _pick_row_tile(rows, width)
        cost = pl.CostEstimate(flops=2 * rows * pack * width + rows * width,
                               transcendentals=0,
                               bytes_accessed=n_pad * 4 + rows * width * 4)
        out = pl.pallas_call(
            functools.partial(_one_hot_packed_kernel, num_classes=c),
            out_shape=jax.ShapeDtypeStruct((rows, width), jnp.float32),
            grid_spec=pltpu.PrefetchScalarGridSpec(
                num_scalar_prefetch=0,
                grid=(pl.cdiv(rows, tn),),
                in_specs=[pl.BlockSpec((tn, pack), lambda i: (i, 0)),
                          pl.BlockSpec((pack, width), lambda i: (0, 0)),
                          pl.BlockSpec((1, width), lambda i: (0, 0))],
                out_specs=pl.BlockSpec((tn, width), lambda i: (i, 0)),
            ),
            compiler_params=pltpu.CompilerParams(
                dimension_semantics=("parallel",)),
            cost_estimate=cost,
        )(x2, rep, cls)
        # Row-major (rows, pack*c) has the same logical element order as
        # (rows*pack, c).
        # TODO(synk): verify in xprof/HLO that this reshape (+ the [:n] slice
        # when n % pack != 0) does not insert an HBM relayout copy; if it does,
        # expose the packed (rows, width) layout to the consumer and fold the
        # reshape into the next op.
        out = out.reshape(rows * pack, c)
        if n_pad != n:
            out = out[:n]
        return out.reshape(*orig_shape, c)

    # ---- General path: 2-D (row tiles, class tiles) parallel grid ----
    tc = min(_round_up(c, 128), 2048)       # partial last class tile is masked
    x2 = x_flat.reshape(n, 1)
    tn = _pick_row_tile(n, tc)
    cost = pl.CostEstimate(flops=2 * n * c, transcendentals=0,
                           bytes_accessed=n * 4 + n * c * 4)
    out = pl.pallas_call(
        functools.partial(_one_hot_tiled_kernel, tc=tc),
        out_shape=jax.ShapeDtypeStruct((n, c), jnp.float32),
        grid_spec=pltpu.PrefetchScalarGridSpec(
            num_scalar_prefetch=0,
            grid=(pl.cdiv(n, tn), pl.cdiv(c, tc)),
            in_specs=[pl.BlockSpec((tn, 1), lambda i, j: (i, 0))],
            out_specs=pl.BlockSpec((tn, tc), lambda i, j: (i, j)),
        ),
        compiler_params=pltpu.CompilerParams(
            dimension_semantics=("parallel", "parallel")),
        cost_estimate=cost,
    )(x2)
    return out.reshape(*orig_shape, c)


if __name__ == "__main__":
    key = jax.random.PRNGKey(0)
    k1, k2, k3, k4, k5 = jax.random.split(key, 5)

    # Case 1: small num_classes (16), shape (2, 4) -> packed path, exact multiple.
    c1 = 16
    x1 = jax.random.randint(k1, (2, 4), 0, c1, dtype=jnp.int32)
    y1 = jax.block_until_ready(one_hot_pallas(x1, num_classes=c1))
    assert y1.shape == (2, 4, c1) and y1.dtype == jnp.float32
    assert jnp.array_equal(y1, jax.nn.one_hot(x1, c1, dtype=jnp.float32))

    # Case 2: "single-element tensor" (scalar), as in the module docstring
    # -> packed path with -1 sentinel padding.
    x2 = jax.random.randint(k2, (), 0, c1, dtype=jnp.int32)
    y2 = jax.block_until_ready(one_hot_pallas(x2, num_classes=c1))
    assert y2.shape == (c1,)
    assert jnp.array_equal(y2, jax.nn.one_hot(x2, c1, dtype=jnp.float32))

    # Case 3: num_classes not dividing 128 (10) -> gcd-generalized packed path
    # (pack=64, width=640) with padding since n=15 is not a multiple of pack.
    c3 = 10
    x3 = jax.random.randint(k3, (3, 5), 0, c3, dtype=jnp.int32)
    y3 = jax.block_until_ready(one_hot_pallas(x3, num_classes=c3))
    assert jnp.array_equal(y3, jax.nn.one_hot(x3, c3, dtype=jnp.float32))

    # Case 4: num_classes multiple of 128 -> general class-tiled path.
    c4 = 256
    x4 = jax.random.randint(k4, (2, 3), 0, c4, dtype=jnp.int32)
    y4 = jax.block_until_ready(one_hot_pallas(x4, num_classes=c4))
    assert jnp.array_equal(y4, jax.nn.one_hot(x4, c4, dtype=jnp.float32))

    # Case 5: num_classes >= 128, not a multiple of 128 -> general path with a
    # masked partial class tile (tc rounded up to 256).
    c5 = 130
    x5 = jax.random.randint(k5, (4, 3), 0, c5, dtype=jnp.int32)
    y5 = jax.block_until_ready(one_hot_pallas(x5, num_classes=c5))
    assert jnp.array_equal(y5, jax.nn.one_hot(x5, c5, dtype=jnp.float32))

    print("KERNEL_OK")
</pallas_src>

<mosaic_0001>
module attributes {stable_mosaic.version = 11 : i64} {
  func.func @_one_hot_packed_kernel(%arg0: i32, %arg1: memref<8x8xi32, #tpu.memory_space<vmem>>, %arg2: memref<8x128xbf16, #tpu.memory_space<vmem>>, %arg3: memref<1x128xf32, #tpu.memory_space<vmem>>, %arg4: memref<8x128xf32, #tpu.memory_space<vmem>>) attributes {dimension_semantics = [#tpu.dimension_semantics<parallel>], iteration_bounds = array<i64: 1>, scalar_prefetch = 0 : i64, scratch_operands = 0 : i64, tpu.core_type = #tpu.core_type<tc>, window_params = [{transform_indices = @transform_0, window_bounds = array<i64: 8, 8>}, {pipeline_mode = #tpu.pipeline_mode<synchronous>, transform_indices = @transform_1, window_bounds = array<i64: 8, 128>}, {pipeline_mode = #tpu.pipeline_mode<synchronous>, transform_indices = @transform_2, window_bounds = array<i64: 1, 128>}, {transform_indices = @transform_3, window_bounds = array<i64: 8, 128>}]} {
    %c0 = arith.constant 0 : index
    %c0_0 = arith.constant 0 : index
    %0 = vector.load %arg1[%c0, %c0_0] : memref<8x8xi32, #tpu.memory_space<vmem>>, vector<8x8xi32>
    %c0_i32 = arith.constant 0 : i32
    %1 = vector.broadcast %c0_i32 : i32 to vector<8x8xi32>
    %2 = arith.cmpi sge, %0, %1 : vector<8x8xi32>
    %c16_i32 = arith.constant 16 : i32
    %3 = vector.broadcast %c16_i32 : i32 to vector<8x8xi32>
    %4 = arith.cmpi slt, %0, %3 : vector<8x8xi32>
    %5 = arith.andi %2, %4 : vector<8x8xi1>
    %c-1_i32 = arith.constant -1 : i32
    %6 = vector.broadcast %c-1_i32 : i32 to vector<8x8xi32>
    %7 = arith.select %5, %0, %6 : vector<8x8xi1>, vector<8x8xi32>
    %8 = arith.sitofp %7 : vector<8x8xi32> to vector<8x8xf32>
    %9 = arith.truncf %8 : vector<8x8xf32> to vector<8x8xbf16>
    %c0_1 = arith.constant 0 : index
    %c0_2 = arith.constant 0 : index
    %10 = vector.load %arg2[%c0_1, %c0_2] : memref<8x128xbf16, #tpu.memory_space<vmem>>, vector<8x128xbf16>
    %cst = arith.constant dense<0.000000e+00> : vector<8x128xf32>
    %11 = tpu.matmul %9, %10, %cst {dimension_numbers = #tpu.dot_dimension_numbers<[1], [0], [0], [1], [0, 0, 1, 1], [], []>} : vector<8x8xbf16>, vector<8x128xbf16>, vector<8x128xf32> -> vector<8x128xf32>
    %c0_3 = arith.constant 0 : index
    %c0_4 = arith.constant 0 : index
    %12 = vector.load %arg3[%c0_3, %c0_4] : memref<1x128xf32, #tpu.memory_space<vmem>>, vector<1x128xf32>
    %13 = vector.broadcast %12 : vector<1x128xf32> to vector<8x128xf32>
    %14 = arith.cmpf oeq, %11, %13 : vector<8x128xf32>
    %15 = arith.extui %14 : vector<8x128xi1> to vector<8x128xi32>
    %16 = arith.sitofp %15 : vector<8x128xi32> to vector<8x128xf32>
    %c0_5 = arith.constant 0 : index
    %c0_6 = arith.constant 0 : index
    %17 = vector.load %arg4[%c0_5, %c0_6] : memref<8x128xf32, #tpu.memory_space<vmem>>, vector<8x128xf32>
    tpu.vector_store %arg4[%c0_5, %c0_6], %16 {strides = array<i32>} : memref<8x128xf32, #tpu.memory_space<vmem>>, vector<8x128xf32>,
    return
  }
  func.func @transform_0(%arg0: i32) -> (i32, i32) {
    %c0_i32 = arith.constant 0 : i32
    %c0_i32_0 = arith.constant 0 : i32
    return %arg0, %c0_i32 : i32, i32
  }
  func.func @transform_1(%arg0: i32) -> (i32, i32) {
    %c0_i32 = arith.constant 0 : i32
    %c0_i32_0 = arith.constant 0 : i32
    %c0_i32_1 = arith.constant 0 : i32
    return %c0_i32, %c0_i32_0 : i32, i32
  }
  func.func @transform_2(%arg0: i32) -> (i32, i32) {
    %c0_i32 = arith.constant 0 : i32
    %c0_i32_0 = arith.constant 0 : i32
    %c0_i32_1 = arith.constant 0 : i32
    return %c0_i32, %c0_i32_0 : i32, i32
  }
  func.func @transform_3(%arg0: i32) -> (i32, i32) {
    %c0_i32 = arith.constant 0 : i32
    %c0_i32_0 = arith.constant 0 : i32
    return %arg0, %c0_i32 : i32, i32
  }
}

</mosaic_0001>

<llo_original>
// kernel: one_hot_pallas.1
$region0: #{one_hot_pallas.1}
  #allocation0 [shape = 'u32[]', space=smem, size = 0x4, offset = 0x4, fixed_abs, tag = 'smem constant byte address 0x4 - core index']
  #allocation1 [shape = 'u32[144,128]{1,0:T(1,128)}', space=vmem, size = 0x12000, scoped, tag = 'internal scratch']
  %s0 = inlined_call_operand.vmem [shape: s32[1,8], index: 0, kind: input, shape index: {}]
  %s1 = inlined_call_operand.vmem [shape: bf16[8,128], index: 1, kind: input, shape index: {}]
  %s2 = inlined_call_operand.vmem [shape: f32[1,128], index: 2, kind: input, shape index: {}]
  %s3 = inlined_call_operand.vmem [shape: f32[1,128], index: 3, kind: output, shape index: {}]
  %s4 = sld [smem:[#allocation0]]
  $region52: #{one_hot_pallas.1} parent=0
    _
  %s6 = ssub.s32 1, %s4
  %s7 = scalar_select 0, %s6, %s4
  $region1: #{one_hot_pallas.1} parent=0
    #allocation2 [shape = 'u8[4096]{0}', space=vmem, size = 0x1000, scoped, tag = 'output window, operand 0, single buffered']
    // Predicated region
    $region2: #{one_hot_pallas.1} parent=1 // pred_check
      _
    $region3: #{one_hot_pallas.1} parent=1 // pred_check_branch
      %9 = sbr.rel (0) target = $region5
    $region4: #{one_hot_pallas.1} parent=1 // pred_region
      _
    $region5: #{one_hot_pallas.1} parent=1 // pred_fallthru
      _
    // Predicated region
    $region6: #{one_hot_pallas.1} parent=1 // pred_check
      _
    $region7: #{one_hot_pallas.1} parent=1 // pred_check_branch
      %11 = sbr.rel (0) target = $region9
    $region8: #{one_hot_pallas.1} parent=1 // pred_region
      _
    $region9: #{one_hot_pallas.1} parent=1 // pred_fallthru
      _
    // Predicated region
    $region10: #{one_hot_pallas.1} parent=1 // pred_check
      _
    $region11: #{one_hot_pallas.1} parent=1 // pred_check_branch
      %13 = sbr.rel (0) target = $region13
    $region12: #{one_hot_pallas.1} parent=1 // pred_region
      _
    $region13: #{one_hot_pallas.1} parent=1 // pred_fallthru
      _
    %v15 = vld [vmem:[%s0] sm:$0xff]
    %vm16 = vcmp.ge.s32.totalorder %v15, 0
    %vm17 = vcmp.lt.s32.totalorder %v15, 16
    %vm18 = vmand %vm16, %vm17
    %v19 = vsel %vm18, %v15, 4294967295
    %v20 = vcvt.s32.f32 %v19
    %v21 = vpack.c.bf16 %v20, %v20
    %v22 = vld [vmem:[%s1] sm:$0xf]
    %vm23 = vcmask 64512
    %v25 = vsel %vm23, %v21, 0
    %vm27 = vcmask 1043456
    %v29 = vsel %vm27, %v22, 0
    %31 = vmatprep.subr.bf16.mxu0 0
    %32 = vmatpush1.bf16.msra.mxu0 %v29
    %33 = vmatprep.subr.bf16.mxu0 0
    %34 = vmatpush1.bf16.msra.mxu0 0
    %35 = vmatprep.subr.bf16.mxu0 0
    %36 = vmatpush1.bf16.msra.mxu0 0
    %37 = vmatprep.subr.bf16.mxu0 0
    %38 = vmatpush1.bf16.msra.mxu0 0
    %39 = vmatprep.subr.bf16.mxu0 0
    %40 = vmatpush1.bf16.msra.mxu0 0
    %41 = vmatprep.subr.bf16.mxu0 0
    %42 = vmatpush1.bf16.msra.mxu0 0
    %43 = vmatprep.subr.bf16.mxu0 0
    %44 = vmatpush1.bf16.msra.mxu0 0
    %45 = vmatprep.subr.bf16.mxu0 0
    %46 = vmatpush1.bf16.msra.mxu0 0
    %47 = vmatprep.subr.bf16.mxu0 0
    %48 = vmatpush1.bf16.msra.mxu0 0
    %49 = vmatprep.subr.bf16.mxu0 0
    %50 = vmatpush1.bf16.msra.mxu0 0
    %51 = vmatprep.subr.bf16.mxu0 0
    %52 = vmatpush1.bf16.msra.mxu0 0
    %53 = vmatprep.subr.bf16.mxu0 0
    %54 = vmatpush1.bf16.msra.mxu0 0
    %55 = vmatprep.subr.bf16.mxu0 0
    %56 = vmatpush1.bf16.msra.mxu0 0
    %57 = vmatprep.subr.bf16.mxu0 0
    %58 = vmatpush1.bf16.msra.mxu0 0
    %59 = vmatprep.subr.bf16.mxu0 0
    %60 = vmatpush1.bf16.msra.mxu0 0
    %61 = vmatprep.subr.bf16.mxu0 0
    %62 = vmatpush1.bf16.msra.mxu0 0
    %63 = vmatprep.mubr.bf16.mxu0 0
    %64 = vmatmul.mubr.bf16.gmra.mrb[0].mxu0 %v25
    %v65 = vpop.f32.mrb[0].mxu0
    %v66 = vadd.f32 0.0, %v65
    %v67 = vpop.f32.mrb[0].mxu0
    %v68 = vpop.f32.mrb[0].mxu0
    %v69 = vpop.f32.mrb[0].mxu0
    %70 = vdwg.mxu0
    %v71 = vld [vmem:[%s2] sm:$0x1]
    %v73 = vlaneseq
    %v74 = vshrl.u32 %v73, 7
    %v75 = vsub.s32 0, %v74
    %v76 = vrot.slane %v71, %v75
    %vm78 = vcmp.eq.f32.partialorder %v66, %v76
    %v79 = vsel %vm78, 1, 0
    %v80 = vcvt.s32.f32 %v79
    %81 = vst [vmem:[#allocation2] sm:$0xff] %v80
    // Predicated region
    $region14: #{one_hot_pallas.1} parent=1 // pred_check
      _
    $region15: #{one_hot_pallas.1} parent=1 // pred_check_branch
      %83 = sbr.rel (0) target = $region17
    $region16: #{one_hot_pallas.1} parent=1 // pred_region
      // Predicated region
      $region18: #{one_hot_pallas.1} parent=16 // pred_check
        _
      $region19: #{one_hot_pallas.1} parent=16 // pred_check_branch
        %85 = sbr.rel (0) target = $region21
      $region20: #{one_hot_pallas.1} parent=16 // pred_region
        // Predicated region
        $region22: #{one_hot_pallas.1} parent=20 // pred_check
          _
        $region23: #{one_hot_pallas.1} parent=20 // pred_check_branch
          %87 = sbr.rel target = $region25
        $region24: #{one_hot_pallas.1} parent=20 // pred_region
          // Predicated region
          $region37: #{one_hot_pallas.1} parent=24 // pred_check
            _
          $region38: #{one_hot_pallas.1} parent=24 // pred_check_branch
            %102 = sbr.rel (0) target = $region40
          $region39: #{one_hot_pallas.1} parent=24 // pred_region
            loop: start=0, step=1, limit=1
            $region41: #{one_hot_pallas.1} parent=39 // loop_pre_header
              _
            $region42: #{one_hot_pallas.1} parent=39 // loop_header
              %s105 = sphi 0, %s109
              %p106 = scmp.ge.s32.totalorder %s105, 1
              %s110 = sphi [#allocation2], [#allocation2]
              %s111 = sphi %s3, %s3
            $region43: #{one_hot_pallas.1} parent=39 // loop_header_branch
              %108 = sbr.rel (%p106) target = $region47
            $region44: #{one_hot_pallas.1} parent=39 // loop_body
              %v112 = vld [vmem:[%s110] sm:$0x1]
              %113 = vst [vmem:[%s111] sm:$0x1] %v112
            $region45: #{one_hot_pallas.1} parent=39 // loop_footer
              %s109 = sadd.s32 1, %s105
            $region46: #{one_hot_pallas.1} parent=39 // loop_footer_branch
              %104 = sbr.rel target = $region42
            $region47: #{one_hot_pallas.1} parent=39 // loop_exit
              _
          $region40: #{one_hot_pallas.1} parent=24 // pred_fallthru
            _
        $region25: #{one_hot_pallas.1} parent=20 // pred_fallthru
          _
        // Predicated region
        $region26: #{one_hot_pallas.1} parent=20 // pred_check
          _
        $region27: #{one_hot_pallas.1} parent=20 // pred_check_branch
          %89 = sbr.rel (0) target = $region29
        $region28: #{one_hot_pallas.1} parent=20 // pred_region
          loop: start=0, step=1, limit=1
          $region30: #{one_hot_pallas.1} parent=28 // loop_pre_header
            _
          $region31: #{one_hot_pallas.1} parent=28 // loop_header
            %s92 = sphi 0, %s96
            %p93 = scmp.ge.s32.totalorder %s92, 1
            %s97 = sphi [#allocation2], [#allocation2]
            %s98 = sphi %s3, %s3
          $region32: #{one_hot_pallas.1} parent=28 // loop_header_branch
            %95 = sbr.rel (%p93) target = $region36
          $region33: #{one_hot_pallas.1} parent=28 // loop_body
            %v99 = vld [vmem:[%s97] sm:$0x1]
            %100 = vst [vmem:[%s98] sm:$0x1] %v99
          $region34: #{one_hot_pallas.1} parent=28 // loop_footer
            %s96 = sadd.s32 1, %s92
          $region35: #{one_hot_pallas.1} parent=28 // loop_footer_branch
            %91 = sbr.rel target = $region31
          $region36: #{one_hot_pallas.1} parent=28 // loop_exit
            _
        $region29: #{one_hot_pallas.1} parent=20 // pred_fallthru
          _
      $region21: #{one_hot_pallas.1} parent=16 // pred_fallthru
        _
      %114 = vnop
    $region17: #{one_hot_pallas.1} parent=1 // pred_fallthru
      _
    // Predicated region
    $region48: #{one_hot_pallas.1} parent=1 // pred_check
      _
    $region49: #{one_hot_pallas.1} parent=1 // pred_check_branch
      %116 = sbr.rel (0) target = $region51
    $region50: #{one_hot_pallas.1} parent=1 // pred_region
      _
    $region51: #{one_hot_pallas.1} parent=1 // pred_fallthru
      _

</llo_original>
